<compile_context>
chip_gen: v6e
topology: v6e:2x2x1
jax: 0.10.0
libtpu: 0.0.40
codegen_flags: <defaults>
</compile_context>

<pallas_src>
import jax
import jax.numpy as jnp
from jax import lax
from jax.experimental import pallas as pl
from jax.experimental.pallas import tpu as pltpu


def _head_kernel(x_ref, w1_ref, b1_ref, w2_ref, b2_ref, logits_ref, emb_ref):
    # x_ref:  [TB, H] f32        w1_ref: [H,  H ] bf16  (PyTorch [out, in] layout)
    # b1_ref: [1, H]  f32        w2_ref: [Lp, H ] bf16  (zero-padded to Lp lanes)
    # b2_ref: [1, Lp] f32
    x = x_ref[...].astype(jnp.bfloat16)

    # dense: x @ W1^T -- contract the "in" dims of both operands; the MXU does
    # the transposed contraction natively (no transposed weight copy needed).
    h = lax.dot_general(
        x, w1_ref[...], (((1,), (1,)), ((), ())),
        preferred_element_type=jnp.float32,
    )
    emb = jnp.tanh(h + b1_ref[...])              # f32 epilogue (v5e-safe)
    emb_ref[...] = emb.astype(emb_ref.dtype)

    # TODO(synk): dropout is identity in eval mode; training-mode dropout
    # (pltpu.prng_seed + pltpu.prng_random_bits masking) intentionally omitted.

    # out_proj into a lane-dense Lp(=multiple of 128)-wide tile: emb @ W2^T + b2
    logits = lax.dot_general(
        emb.astype(jnp.bfloat16), w2_ref[...], (((1,), (1,)), ((), ())),
        preferred_element_type=jnp.float32,
    ) + b2_ref[...]
    logits_ref[...] = logits.astype(logits_ref.dtype)


def roberta_classification_head(features, w_dense, b_dense, w_out, b_out,
                                *, block_b=256):
    """features: [B, S, H]; w_dense: [H, H] (PyTorch [out, in]); b_dense: [H];
    w_out: [L, H]; b_out: [L].  Returns (logits [B, L], emb [B, H])."""
    B, S, H = features.shape
    L = w_out.shape[0]
    Lp = ((L + 127) // 128) * 128            # lane-dense padded label dim (>=128)

    # Batch tile: <= block_b rows.  Even at H = 1024 a (TB, H) f32 tile plus the
    # resident bf16 weights is well inside the default scoped-VMEM budget (and
    # v7x's smaller 64 MiB physical VMEM).
    TB = B if B <= block_b else block_b
    grid = (pl.cdiv(B, TB),)

    if H % 128 == 0:
        # Free (layout-preserving) reshape: the CLS token is the first H columns
        # of each [S*H] row, so a (TB, H) window at column-block 0 reads it
        # directly from HBM -- no x0 materialization / extra HBM round-trip.
        x_in = features.reshape(B, S * H)
    else:
        x_in = features[:, 0, :]             # fallback: explicit CLS slice

    # bf16 weights halve HBM traffic for the dominant H*H load and hit the bf16
    # MXU rate on all of v5e/v6e/v7x; biases stay f32 for the f32 epilogue.
    w1 = w_dense.astype(jnp.bfloat16)                               # [H,  H]
    w2 = jnp.zeros((Lp, H), jnp.bfloat16).at[:L, :].set(
        w_out.astype(jnp.bfloat16))                                 # [Lp, H]
    b1 = b_dense.reshape(1, H).astype(jnp.float32)                  # [1,  H]
    b2 = jnp.zeros((1, Lp), jnp.float32).at[0, :L].set(
        b_out.astype(jnp.float32))                                  # [1, Lp]

    logits_p, emb = pl.pallas_call(
        _head_kernel,
        grid=grid,
        in_specs=[
            pl.BlockSpec((TB, H), lambda i: (i, 0)),    # CLS rows, tiled over batch
            pl.BlockSpec((H, H), lambda i: (0, 0)),     # resident across batch tiles
            pl.BlockSpec((1, H), lambda i: (0, 0)),
            pl.BlockSpec((Lp, H), lambda i: (0, 0)),
            pl.BlockSpec((1, Lp), lambda i: (0, 0)),
        ],
        out_specs=(
            pl.BlockSpec((TB, Lp), lambda i: (i, 0)),   # lane-dense padded logits
            pl.BlockSpec((TB, H), lambda i: (i, 0)),
        ),
        out_shape=(
            jax.ShapeDtypeStruct((B, Lp), features.dtype),
            jax.ShapeDtypeStruct((B, H), features.dtype),
        ),
        compiler_params=pltpu.CompilerParams(
            dimension_semantics=("parallel",),          # megacore-shard batch axis
        ),
        cost_estimate=pl.CostEstimate(
            flops=2 * B * H * (H + Lp),
            transcendentals=B * H,
            bytes_accessed=(B * H * 4          # CLS rows in
                            + H * H * 2        # dense weight (bf16)
                            + Lp * H * 2       # out_proj weight (bf16)
                            + B * H * 4        # emb out
                            + B * Lp * 4),     # padded logits out
        ),
    )(x_in, w1, b1, w2, b2)

    return logits_p[:, :L], emb


if __name__ == "__main__":
    # Small, deterministic config: batch=2, seq=8, hidden=128, num_labels=2
    B, S, H, L = 2, 8, 128, 2

    key = jax.random.PRNGKey(0)
    k_feat, k_w1, k_b1, k_w2, k_b2 = jax.random.split(key, 5)

    features = jax.random.normal(k_feat, (B, S, H), dtype=jnp.float32)

    # Deterministic parameter init (uniform, like nn.Linear's default range).
    bound1 = 1.0 / (H ** 0.5)
    w_dense = jax.random.uniform(k_w1, (H, H), jnp.float32, -bound1, bound1)
    b_dense = jax.random.uniform(k_b1, (H,), jnp.float32, -bound1, bound1)
    w_out = jax.random.uniform(k_w2, (L, H), jnp.float32, -bound1, bound1)
    b_out = jax.random.uniform(k_b2, (L,), jnp.float32, -bound1, bound1)

    logits, emb = roberta_classification_head(
        features, w_dense, b_dense, w_out, b_out
    )
    jax.block_until_ready((logits, emb))
    assert logits.shape == (B, L) and emb.shape == (B, H)

    # Reference in plain JAX with the same bf16 operand rounding the kernel
    # uses (f32 accumulation), so the comparison can be tight.
    x0 = features[:, 0, :]
    q = lambda a: a.astype(jnp.bfloat16).astype(jnp.float32)
    emb_ref = jnp.tanh(q(x0) @ q(w_dense).T + b_dense)
    logits_ref = q(emb_ref) @ q(w_out).T + b_out

    assert jnp.allclose(emb, emb_ref, atol=5e-3), "embedding mismatch"
    assert jnp.allclose(logits, logits_ref, atol=5e-3), "logits mismatch"

    print("KERNEL_OK")
</pallas_src>

<mosaic_0001>
module attributes {stable_mosaic.version = 11 : i64} {
  func.func @_head_kernel(%arg0: i32, %arg1: memref<2x128xf32, #tpu.memory_space<vmem>>, %arg2: memref<128x128xbf16, #tpu.memory_space<vmem>>, %arg3: memref<1x128xf32, #tpu.memory_space<vmem>>, %arg4: memref<128x128xbf16, #tpu.memory_space<vmem>>, %arg5: memref<1x128xf32, #tpu.memory_space<vmem>>, %arg6: memref<2x128xf32, #tpu.memory_space<vmem>>, %arg7: memref<2x128xf32, #tpu.memory_space<vmem>>) attributes {dimension_semantics = [#tpu.dimension_semantics<parallel>], iteration_bounds = array<i64: 1>, scalar_prefetch = 0 : i64, scratch_operands = 0 : i64, tpu.core_type = #tpu.core_type<tc>, window_params = [{transform_indices = @transform_0, window_bounds = array<i64: 2, 128>}, {pipeline_mode = #tpu.pipeline_mode<synchronous>, transform_indices = @transform_1, window_bounds = array<i64: 128, 128>}, {pipeline_mode = #tpu.pipeline_mode<synchronous>, transform_indices = @transform_2, window_bounds = array<i64: 1, 128>}, {pipeline_mode = #tpu.pipeline_mode<synchronous>, transform_indices = @transform_3, window_bounds = array<i64: 128, 128>}, {pipeline_mode = #tpu.pipeline_mode<synchronous>, transform_indices = @transform_4, window_bounds = array<i64: 1, 128>}, {transform_indices = @transform_5, window_bounds = array<i64: 2, 128>}, {transform_indices = @transform_6, window_bounds = array<i64: 2, 128>}]} {
    %c0 = arith.constant 0 : index
    %c0_0 = arith.constant 0 : index
    %0 = vector.load %arg1[%c0, %c0_0] : memref<2x128xf32, #tpu.memory_space<vmem>>, vector<2x128xf32>
    %1 = arith.truncf %0 : vector<2x128xf32> to vector<2x128xbf16>
    %c0_1 = arith.constant 0 : index
    %c0_2 = arith.constant 0 : index
    %2 = vector.load %arg2[%c0_1, %c0_2] : memref<128x128xbf16, #tpu.memory_space<vmem>>, vector<128x128xbf16>
    %cst = arith.constant dense<0.000000e+00> : vector<2x128xf32>
    %3 = tpu.matmul %1, %2, %cst {dimension_numbers = #tpu.dot_dimension_numbers<[1], [1], [0], [0], [0, 0, 1, 0], [], []>} : vector<2x128xbf16>, vector<128x128xbf16>, vector<2x128xf32> -> vector<2x128xf32>
    %c0_3 = arith.constant 0 : index
    %c0_4 = arith.constant 0 : index
    %4 = vector.load %arg3[%c0_3, %c0_4] : memref<1x128xf32, #tpu.memory_space<vmem>>, vector<1x128xf32>
    %5 = vector.broadcast %4 : vector<1x128xf32> to vector<2x128xf32>
    %6 = arith.addf %3, %5 : vector<2x128xf32>
    %7 = math.tanh %6 : vector<2x128xf32>
    %c0_5 = arith.constant 0 : index
    %c0_6 = arith.constant 0 : index
    %8 = vector.load %arg7[%c0_5, %c0_6] : memref<2x128xf32, #tpu.memory_space<vmem>>, vector<2x128xf32>
    tpu.vector_store %arg7[%c0_5, %c0_6], %7 {strides = array<i32>} : memref<2x128xf32, #tpu.memory_space<vmem>>, vector<2x128xf32>,
    %9 = arith.truncf %7 : vector<2x128xf32> to vector<2x128xbf16>
    %c0_7 = arith.constant 0 : index
    %c0_8 = arith.constant 0 : index
    %10 = vector.load %arg4[%c0_7, %c0_8] : memref<128x128xbf16, #tpu.memory_space<vmem>>, vector<128x128xbf16>
    %cst_9 = arith.constant dense<0.000000e+00> : vector<2x128xf32>
    %11 = tpu.matmul %9, %10, %cst_9 {dimension_numbers = #tpu.dot_dimension_numbers<[1], [1], [0], [0], [0, 0, 1, 0], [], []>} : vector<2x128xbf16>, vector<128x128xbf16>, vector<2x128xf32> -> vector<2x128xf32>
    %c0_10 = arith.constant 0 : index
    %c0_11 = arith.constant 0 : index
    %12 = vector.load %arg5[%c0_10, %c0_11] : memref<1x128xf32, #tpu.memory_space<vmem>>, vector<1x128xf32>
    %13 = vector.broadcast %12 : vector<1x128xf32> to vector<2x128xf32>
    %14 = arith.addf %11, %13 : vector<2x128xf32>
    %c0_12 = arith.constant 0 : index
    %c0_13 = arith.constant 0 : index
    %15 = vector.load %arg6[%c0_12, %c0_13] : memref<2x128xf32, #tpu.memory_space<vmem>>, vector<2x128xf32>
    tpu.vector_store %arg6[%c0_12, %c0_13], %14 {strides = array<i32>} : memref<2x128xf32, #tpu.memory_space<vmem>>, vector<2x128xf32>,
    return
  }
  func.func @transform_0(%arg0: i32) -> (i32, i32) {
    %c0_i32 = arith.constant 0 : i32
    %c0_i32_0 = arith.constant 0 : i32
    return %arg0, %c0_i32 : i32, i32
  }
  func.func @transform_1(%arg0: i32) -> (i32, i32) {
    %c0_i32 = arith.constant 0 : i32
    %c0_i32_0 = arith.constant 0 : i32
    %c0_i32_1 = arith.constant 0 : i32
    return %c0_i32, %c0_i32_0 : i32, i32
  }
  func.func @transform_2(%arg0: i32) -> (i32, i32) {
    %c0_i32 = arith.constant 0 : i32
    %c0_i32_0 = arith.constant 0 : i32
    %c0_i32_1 = arith.constant 0 : i32
    return %c0_i32, %c0_i32_0 : i32, i32
  }
  func.func @transform_3(%arg0: i32) -> (i32, i32) {
    %c0_i32 = arith.constant 0 : i32
    %c0_i32_0 = arith.constant 0 : i32
    %c0_i32_1 = arith.constant 0 : i32
    return %c0_i32, %c0_i32_0 : i32, i32
  }
  func.func @transform_4(%arg0: i32) -> (i32, i32) {
    %c0_i32 = arith.constant 0 : i32
    %c0_i32_0 = arith.constant 0 : i32
    %c0_i32_1 = arith.constant 0 : i32
    return %c0_i32, %c0_i32_0 : i32, i32
  }
  func.func @transform_5(%arg0: i32) -> (i32, i32) {
    %c0_i32 = arith.constant 0 : i32
    %c0_i32_0 = arith.constant 0 : i32
    return %arg0, %c0_i32 : i32, i32
  }
  func.func @transform_6(%arg0: i32) -> (i32, i32) {
    %c0_i32 = arith.constant 0 : i32
    %c0_i32_0 = arith.constant 0 : i32
    return %arg0, %c0_i32 : i32, i32
  }
}

</mosaic_0001>

<llo_original>
// kernel: tpu_custom_call.1
$region0: #{tpu_custom_call.1}
  #allocation0 [shape = 'u32[]', space=smem, size = 0x4, offset = 0x4, fixed_abs, tag = 'smem constant byte address 0x4 - core index']
  #allocation1 [shape = 'u32[144,128]{1,0:T(1,128)}', space=vmem, size = 0x12000, scoped, tag = 'internal scratch']
  %s0 = inlined_call_operand.hbm [shape: f32[2,1024], index: 0, kind: input, shape index: {}]
  %s1 = inlined_call_operand.hbm [shape: bf16[128,128], index: 1, kind: input, shape index: {}]
  %s2 = inlined_call_operand.vmem [shape: f32[1,128], index: 2, kind: input, shape index: {}]
  %s3 = inlined_call_operand.hbm [shape: bf16[128,128], index: 3, kind: input, shape index: {}]
  %s4 = inlined_call_operand.vmem [shape: f32[1,128], index: 4, kind: input, shape index: {}]
  %s5 = inlined_call_operand.hbm [shape: f32[2,128], index: 5, kind: output, shape index: {0}]
  %s6 = inlined_call_operand.hbm [shape: f32[2,128], index: 6, kind: output, shape index: {1}]
  %7 = xla_tuple %s5, %s6
  %s8 = sld [smem:[#allocation0]]
  $region50: #{tpu_custom_call.1} parent=0
    _
  %s10 = ssub.s32 1, %s8
  %s11 = scalar_select 0, %s10, %s8
  $region1: #{tpu_custom_call.1} parent=0
    #allocation2 [shape = 'u8[1024]{0}', space=vmem, size = 0x400, scoped, tag = 'input window, operand 0, single buffered']
    #allocation3 [shape = 's32[1]{0}', space=sflag, size = 0x4, scoped, tag = 'scoped memory for tpu_custom_call.1']
    #allocation4 [shape = 's32[1]{0}', space=sflag, size = 0x4, scoped, tag = 'scoped memory for tpu_custom_call.1']
    #allocation5 [shape = 'u8[32768]{0}', space=vmem, size = 0x8000, scoped, tag = 'input window, operand 1, single buffered']
    #allocation6 [shape = 's32[1]{0}', space=sflag, size = 0x4, scoped, tag = 'scoped memory for tpu_custom_call.1']
    #allocation7 [shape = 'u8[32768]{0}', space=vmem, size = 0x8000, scoped, tag = 'input window, operand 3, single buffered']
    #allocation8 [shape = 'u8[1024]{0}', space=vmem, size = 0x400, scoped, tag = 'output window, operand 0, single buffered']
    #allocation9 [shape = 'u8[1024]{0}', space=vmem, size = 0x400, scoped, tag = 'output window, operand 1, single buffered']
    #allocation10 [shape = 's32[1]{0}', space=sflag, size = 0x4, scoped, tag = 'scoped memory for tpu_custom_call.1']
    %12 = vsyncpa [#allocation3], 0
    %13 = vsyncpa [#allocation6], 0
    %14 = vsyncpa [#allocation4], 0
    %15 = vsyncpa [#allocation10], 0
    // Predicated region
    $region2: #{tpu_custom_call.1} parent=1 // pred_check
      _
    $region3: #{tpu_custom_call.1} parent=1 // pred_check_branch
      %17 = sbr.rel (0) target = $region5
    $region4: #{tpu_custom_call.1} parent=1 // pred_region
      %s19 = ssub.s32 32, 32
      %20 = vsyncadd [#allocation3], %s19
      %s22 = sshll.u32 [#allocation2], 4
      %s23 = int_to_ptr.vmem [resolvable:$true] %s22
      %25 = dma.hbm_to_vmem [thread:$0]  %s0, 32, %s23, [#allocation3]
    $region5: #{tpu_custom_call.1} parent=1 // pred_fallthru
      _
    // Predicated region
    $region6: #{tpu_custom_call.1} parent=1 // pred_check
      _
    $region7: #{tpu_custom_call.1} parent=1 // pred_check_branch
      %27 = sbr.rel (0) target = $region9
    $region8: #{tpu_custom_call.1} parent=1 // pred_region
      %s29 = ssub.s32 1024, 1024
      %30 = vsyncadd [#allocation6], %s29
      %s31 = sshll.u32 [#allocation5], 4
      %s32 = int_to_ptr.vmem [resolvable:$true] %s31
      %37 = dma.hbm_to_vmem [thread:$0]  %s1, 1024, %s32, [#allocation6], 64, 64, 4
    $region9: #{tpu_custom_call.1} parent=1 // pred_fallthru
      _
    // Predicated region
    $region10: #{tpu_custom_call.1} parent=1 // pred_check
      _
    $region11: #{tpu_custom_call.1} parent=1 // pred_check_branch
      %39 = sbr.rel (0) target = $region13
    $region12: #{tpu_custom_call.1} parent=1 // pred_region
      _
    $region13: #{tpu_custom_call.1} parent=1 // pred_fallthru
      _
    // Predicated region
    $region14: #{tpu_custom_call.1} parent=1 // pred_check
      _
    $region15: #{tpu_custom_call.1} parent=1 // pred_check_branch
      %41 = sbr.rel (0) target = $region17
    $region16: #{tpu_custom_call.1} parent=1 // pred_region
      %s43 = ssub.s32 1024, 1024
      %44 = vsyncadd [#allocation6], %s43
      %s45 = sshll.u32 [#allocation7], 4
      %s46 = int_to_ptr.vmem [resolvable:$true] %s45
      %51 = dma.hbm_to_vmem [thread:$0]  %s3, 1024, %s46, [#allocation6], 64, 64, 4
    $region17: #{tpu_custom_call.1} parent=1 // pred_fallthru
      _
    // Predicated region
    $region18: #{tpu_custom_call.1} parent=1 // pred_check
      _
    $region19: #{tpu_custom_call.1} parent=1 // pred_check_branch
      %53 = sbr.rel (0) target = $region21
    $region20: #{tpu_custom_call.1} parent=1 // pred_region
      _
    $region21: #{tpu_custom_call.1} parent=1 // pred_fallthru
      _
    // Predicated region
    $region22: #{tpu_custom_call.1} parent=1 // pred_check
      _
    $region23: #{tpu_custom_call.1} parent=1 // pred_check_branch
      %55 = sbr.rel (0) target = $region25
    $region24: #{tpu_custom_call.1} parent=1 // pred_region
      %56 = dma.done [#allocation3], 32
    $region25: #{tpu_custom_call.1} parent=1 // pred_fallthru
      _
    // Predicated region
    $region26: #{tpu_custom_call.1} parent=1 // pred_check
      _
    $region27: #{tpu_custom_call.1} parent=1 // pred_check_branch
      %58 = sbr.rel (0) target = $region29
    $region28: #{tpu_custom_call.1} parent=1 // pred_region
      %59 = dma.done [#allocation6], 1024
    $region29: #{tpu_custom_call.1} parent=1 // pred_fallthru
      _
    // Predicated region
    $region30: #{tpu_custom_call.1} parent=1 // pred_check
      _
    $region31: #{tpu_custom_call.1} parent=1 // pred_check_branch
      %61 = sbr.rel (0) target = $region33
    $region32: #{tpu_custom_call.1} parent=1 // pred_region
      %62 = dma.done [#allocation6], 1024
    $region33: #{tpu_custom_call.1} parent=1 // pred_fallthru
      _
    %v64 = vld [vmem:[#allocation2] sm:$0x3]
    %v65 = vpack.c.bf16 %v64, %v64
    %v66 = vld [vmem:[#allocation5] sm:$0xf]
    %v67 = vld [vmem:[#allocation5 + $0x4] sm:$0xf]
    %v68 = vld [vmem:[#allocation5 + $0x8] sm:$0xf]
    %v69 = vld [vmem:[#allocation5 + $0xc] sm:$0xf]
    %v70 = vld [vmem:[#allocation5 + $0x10] sm:$0xf]
    %v71 = vld [vmem:[#allocation5 + $0x14] sm:$0xf]
    %v72 = vld [vmem:[#allocation5 + $0x18] sm:$0xf]
    %v73 = vld [vmem:[#allocation5 + $0x1c] sm:$0xf]
    %v74 = vld [vmem:[#allocation5 + $0x20] sm:$0xf]
    %v75 = vld [vmem:[#allocation5 + $0x24] sm:$0xf]
    %v76 = vld [vmem:[#allocation5 + $0x28] sm:$0xf]
    %v77 = vld [vmem:[#allocation5 + $0x2c] sm:$0xf]
    %v78 = vld [vmem:[#allocation5 + $0x30] sm:$0xf]
    %v79 = vld [vmem:[#allocation5 + $0x34] sm:$0xf]
    %v80 = vld [vmem:[#allocation5 + $0x38] sm:$0xf]
    %v81 = vld [vmem:[#allocation5 + $0x3c] sm:$0xf]
    %v82 = vld [vmem:[%s2] sm:$0x1]
    %v84 = vlaneseq
    %v85 = vshrl.u32 %v84, 7
    %v86 = vsub.s32 0, %v85
    %v87 = vrot.slane %v82, %v86
    %v105 = vunpack.c.l.b16 %v66
    %v106 = vunpack.c.l.b16 %v67
    %v107 = vunpack.c.l.b16 %v68
    %v108 = vunpack.c.l.b16 %v69
    %v109 = vunpack.c.l.b16 %v70
    %v110 = vunpack.c.l.b16 %v71
    %v111 = vunpack.c.l.b16 %v72
    %v112 = vunpack.c.l.b16 %v73
    %v113 = vunpack.c.l.b16 %v74
    %v114 = vunpack.c.l.b16 %v75
    %v115 = vunpack.c.l.b16 %v76
    %v116 = vunpack.c.l.b16 %v77
    %v117 = vunpack.c.l.b16 %v78
    %v118 = vunpack.c.l.b16 %v79
    %v119 = vunpack.c.l.b16 %v80
    %v120 = vunpack.c.l.b16 %v81
    %v121 = vpack.c.b16 %v106, %v105
    %v122 = vpack.c.b16 %v108, %v107
    %v123 = vpack.c.b16 %v110, %v109
    %v124 = vpack.c.b16 %v112, %v111
    %v125 = vpack.c.b16 %v114, %v113
    %v126 = vpack.c.b16 %v116, %v115
    %v127 = vpack.c.b16 %v118, %v117
    %v128 = vpack.c.b16 %v120, %v119
    %137 = vmatprep.subr.bf16.mxu0 0
    %138 = vmatpush1.bf16.xpose.msra.mxu0 %v128
    %139 = vmatprep.subr.bf16.mxu0 0
    %140 = vmatpush1.bf16.xpose.msra.mxu0 %v127
    %141 = vmatprep.subr.bf16.mxu0 0
    %142 = vmatpush1.bf16.xpose.msra.mxu0 %v126
    %143 = vmatprep.subr.bf16.mxu0 0
    %144 = vmatpush1.bf16.xpose.msra.mxu0 %v125
    %145 = vmatprep.subr.bf16.mxu0 0
    %146 = vmatpush1.bf16.xpose.msra.mxu0 %v124
    %147 = vmatprep.subr.bf16.mxu0 0
    %148 = vmatpush1.bf16.xpose.msra.mxu0 %v123
    %149 = vmatprep.subr.bf16.mxu0 0
    %150 = vmatpush1.bf16.xpose.msra.mxu0 %v122
    %151 = vmatprep.subr.bf16.mxu0 0
    %152 = vmatpush1.bf16.xpose.msra.mxu0 %v121
    %153 = vmatprep.subr.bf16.mxu0 0
    %154 = vmatpush2.bf16.xpose.msra.mxu0 0
    %155 = vmatprep.subr.bf16.mxu0 0
    %156 = vmatpush2.bf16.xpose.msra.mxu0 0
    %157 = vmatprep.subr.bf16.mxu0 0
    %158 = vmatpush2.bf16.xpose.msra.mxu0 0
    %159 = vmatprep.subr.bf16.mxu0 0
    %160 = vmatpush2.bf16.xpose.msra.mxu0 0
    %161 = vmatprep.subr.bf16.mxu0 0
    %162 = vmatpush2.bf16.xpose.msra.mxu0 0
    %163 = vmatprep.subr.bf16.mxu0 0
    %164 = vmatpush2.bf16.xpose.msra.mxu0 0
    %165 = vmatprep.subr.bf16.mxu0 0
    %166 = vmatpush2.bf16.xpose.msra.mxu0 0
    %167 = vmatprep.subr.bf16.mxu0 0
    %168 = vmatpush2.bf16.xpose.msra.mxu0 0
    %169 = vmatprep.mubr.bf16.mxu0 0
    %170 = vmatmul.mubr.bf16.gmra.mxu0 %v65
    %v171 = vpop.f32.mrf.mxu0
    %v172 = vadd.f32 %v87, %v171
    %v173 = vpop.f32.mrf.mxu0
    %v174 = vpop.f32.mrf.mxu0
    %v175 = vpop.f32.mrf.mxu0
    %176 = vdwg.mxu0
    %v177 = vtanh.pop %v172
    %178 = vst [vmem:[#allocation9] sm:$0x3] %v177
    %v179 = vpack.c.bf16 %v177, %v177
    %v180 = vld [vmem:[#allocation7] sm:$0xf]
    %v181 = vld [vmem:[#allocation7 + $0x4] sm:$0xf]
    %v182 = vld [vmem:[#allocation7 + $0x8] sm:$0xf]
    %v183 = vld [vmem:[#allocation7 + $0xc] sm:$0xf]
    %v184 = vld [vmem:[#allocation7 + $0x10] sm:$0xf]
    %v185 = vld [vmem:[#allocation7 + $0x14] sm:$0xf]
    %v186 = vld [vmem:[#allocation7 + $0x18] sm:$0xf]
    %v187 = vld [vmem:[#allocation7 + $0x1c] sm:$0xf]
    %v188 = vld [vmem:[#allocation7 + $0x20] sm:$0xf]
    %v189 = vld [vmem:[#allocation7 + $0x24] sm:$0xf]
    %v190 = vld [vmem:[#allocation7 + $0x28] sm:$0xf]
    %v191 = vld [vmem:[#allocation7 + $0x2c] sm:$0xf]
    %v192 = vld [vmem:[#allocation7 + $0x30] sm:$0xf]
    %v193 = vld [vmem:[#allocation7 + $0x34] sm:$0xf]
    %v194 = vld [vmem:[#allocation7 + $0x38] sm:$0xf]
    %v195 = vld [vmem:[#allocation7 + $0x3c] sm:$0xf]
    %v196 = vld [vmem:[%s4] sm:$0x1]
    %v198 = vlaneseq
    %v199 = vshrl.u32 %v198, 7
    %v200 = vsub.s32 0, %v199
    %v201 = vrot.slane %v196, %v200
    %v219 = vunpack.c.l.b16 %v180
    %v220 = vunpack.c.l.b16 %v181
    %v221 = vunpack.c.l.b16 %v182
    %v222 = vunpack.c.l.b16 %v183
    %v223 = vunpack.c.l.b16 %v184
    %v224 = vunpack.c.l.b16 %v185
    %v225 = vunpack.c.l.b16 %v186
    %v226 = vunpack.c.l.b16 %v187
    %v227 = vunpack.c.l.b16 %v188
    %v228 = vunpack.c.l.b16 %v189
    %v229 = vunpack.c.l.b16 %v190
    %v230 = vunpack.c.l.b16 %v191
    %v231 = vunpack.c.l.b16 %v192
    %v232 = vunpack.c.l.b16 %v193
    %v233 = vunpack.c.l.b16 %v194
    %v234 = vunpack.c.l.b16 %v195
    %v235 = vpack.c.b16 %v220, %v219
    %v236 = vpack.c.b16 %v222, %v221
    %v237 = vpack.c.b16 %v224, %v223
    %v238 = vpack.c.b16 %v226, %v225
    %v239 = vpack.c.b16 %v228, %v227
    %v240 = vpack.c.b16 %v230, %v229
    %v241 = vpack.c.b16 %v232, %v231
    %v242 = vpack.c.b16 %v234, %v233
    %251 = vmatprep.subr.bf16.mxu0 0
    %252 = vmatpush1.bf16.xpose.msra.mxu0 %v242
    %253 = vmatprep.subr.bf16.mxu0 0
    %254 = vmatpush1.bf16.xpose.msra.mxu0 %v241
    %255 = vmatprep.subr.bf16.mxu0 0
    %256 = vmatpush1.bf16.xpose.msra.mxu0 %v240
    %257 = vmatprep.subr.bf16.mxu0 0
    %258 = vmatpush1.bf16.xpose.msra.mxu0 %v239
    %259 = vmatprep.subr.bf16.mxu0 0
    %260 = vmatpush1.bf16.xpose.msra.mxu0 %v238
    %261 = vmatprep.subr.bf16.mxu0 0
    %262 = vmatpush1.bf16.xpose.msra.mxu0 %v237
    %263 = vmatprep.subr.bf16.mxu0 0
    %264 = vmatpush1.bf16.xpose.msra.mxu0 %v236
    %265 = vmatprep.subr.bf16.mxu0 0
    %266 = vmatpush1.bf16.xpose.msra.mxu0 %v235
    %267 = vmatprep.subr.bf16.mxu0 0
    %268 = vmatpush2.bf16.xpose.msra.mxu0 0
    %269 = vmatprep.subr.bf16.mxu0 0
    %270 = vmatpush2.bf16.xpose.msra.mxu0 0
    %271 = vmatprep.subr.bf16.mxu0 0
    %272 = vmatpush2.bf16.xpose.msra.mxu0 0
    %273 = vmatprep.subr.bf16.mxu0 0
    %274 = vmatpush2.bf16.xpose.msra.mxu0 0
    %275 = vmatprep.subr.bf16.mxu0 0
    %276 = vmatpush2.bf16.xpose.msra.mxu0 0
    %277 = vmatprep.subr.bf16.mxu0 0
    %278 = vmatpush2.bf16.xpose.msra.mxu0 0
    %279 = vmatprep.subr.bf16.mxu0 0
    %280 = vmatpush2.bf16.xpose.msra.mxu0 0
    %281 = vmatprep.subr.bf16.mxu0 0
    %282 = vmatpush2.bf16.xpose.msra.mxu0 0
    %283 = vmatprep.mubr.bf16.mxu0 0
    %284 = vmatmul.mubr.bf16.gmra.mxu0 %v179
    %v285 = vpop.f32.mrf.mxu0
    %v286 = vadd.f32 %v201, %v285
    %v287 = vpop.f32.mrf.mxu0
    %v288 = vpop.f32.mrf.mxu0
    %v289 = vpop.f32.mrf.mxu0
    %290 = vdwg.mxu0
    %291 = vst [vmem:[#allocation8] sm:$0x3] %v286
    // Predicated region
    $region34: #{tpu_custom_call.1} parent=1 // pred_check
      _
    $region35: #{tpu_custom_call.1} parent=1 // pred_check_branch
      %293 = sbr.rel (0) target = $region37
    $region36: #{tpu_custom_call.1} parent=1 // pred_region
      %s295 = ssub.s32 32, 32
      %296 = vsyncadd [#allocation4], %s295
      %s298 = sshll.u32 [#allocation8], 4
      %s299 = int_to_ptr.vmem [resolvable:$true] %s298
      %301 = dma.vmem_to_hbm [thread:$0]  %s299, 32, %s5, [#allocation4]
    $region37: #{tpu_custom_call.1} parent=1 // pred_fallthru
      _
    // Predicated region
    $region38: #{tpu_custom_call.1} parent=1 // pred_check
      _
    $region39: #{tpu_custom_call.1} parent=1 // pred_check_branch
      %303 = sbr.rel (0) target = $region41
    $region40: #{tpu_custom_call.1} parent=1 // pred_region
      %s305 = ssub.s32 32, 32
      %306 = vsyncadd [#allocation10], %s305
      %s308 = sshll.u32 [#allocation9], 4
      %s309 = int_to_ptr.vmem [resolvable:$true] %s308
      %311 = dma.vmem_to_hbm [thread:$0]  %s309, 32, %s6, [#allocation10]
    $region41: #{tpu_custom_call.1} parent=1 // pred_fallthru
      _
    // Predicated region
    $region42: #{tpu_custom_call.1} parent=1 // pred_check
      _
    $region43: #{tpu_custom_call.1} parent=1 // pred_check_branch
      %313 = sbr.rel (0) target = $region45
    $region44: #{tpu_custom_call.1} parent=1 // pred_region
      %314 = dma.done [#allocation4], 32
    $region45: #{tpu_custom_call.1} parent=1 // pred_fallthru
      _
    // Predicated region
    $region46: #{tpu_custom_call.1} parent=1 // pred_check
      _
    $region47: #{tpu_custom_call.1} parent=1 // pred_check_branch
      %316 = sbr.rel (0) target = $region49
    $region48: #{tpu_custom_call.1} parent=1 // pred_region
      %317 = dma.done [#allocation10], 32
    $region49: #{tpu_custom_call.1} parent=1 // pred_fallthru
      _
    %318 = vsyncpa [#allocation3], 1
    %319 = vsyncpa [#allocation6], 1
    %320 = vsyncpa [#allocation4], 1
    %321 = vsyncpa [#allocation10], 1

</llo_original>
